<compile_context>
chip_gen: v7x
topology: tpu7x:2x2x1
jax: 0.10.0
libtpu: 0.0.40
codegen_flags: <defaults>
</compile_context>

<pallas_src>
import jax
import jax.numpy as jnp
from jax.experimental import pallas as pl
from jax.experimental.pallas import tpu as pltpu


def _attention_gate_kernel(x_ref, g_ref, wg_ref, wx_ref, b_ref,
                           wpsi_ref, bpsi_ref, out_ref):
    x = x_ref[0]                                   # (F_l, TS), input dtype
    g = g_ref[0]                                   # (F_g, TS), input dtype

    # W_g(g) + W_x(x): 1x1 convs (+ folded BN), weights on the left so the
    # lane axis stays the large spatial tile.  f32 accumulation on the MXU.
    g1 = jnp.dot(wg_ref[...], g, preferred_element_type=jnp.float32)
    x1 = jnp.dot(wx_ref[...], x, preferred_element_type=jnp.float32)

    # Single pre-summed bias (bg + bx), then ReLU.          (F_int, TS) f32
    a = jnp.maximum(g1 + x1 + b_ref[...], 0.0)

    # psi: 1-channel projection as VPU multiply + cross-sublane reduction
    # (avoids a badly shaped width-1 MXU matmul), scalar bias from SMEM,
    # then sigmoid -> (1, TS).
    p = jnp.sum(a * wpsi_ref[...], axis=0, keepdims=True) + bpsi_ref[0]
    p = jax.nn.sigmoid(p)

    # Gate the input in its native dtype (no persistent f32 copy of x).
    out_ref[0] = (x * p.astype(x.dtype)).astype(out_ref.dtype)


def _fold_bn(w, b, gamma, beta, mean, var, eps=1e-5):
    """Fold eval-mode BatchNorm into a preceding 1x1 conv (per out channel)."""
    scale = gamma / jnp.sqrt(var + eps)
    w_f = w * scale[:, None]                       # w: (C_out, C_in)
    b_f = (b - mean) * scale + beta
    return w_f, b_f


def _vmem_budget_cap():
    """Generation-aware VMEM ceiling: ~75% of physical (48 MiB v7x, 96 MiB v5e/v6e)."""
    try:
        cap = int(pltpu.get_tpu_info().vmem_capacity_bytes)
    except Exception:
        cap = 64 * 1024 * 1024                     # conservative (v7x-sized) fallback
    return (cap * 3) // 4


def attention_gate(x, g, params, *, tile_s=4096):
    """x: (B, F_l, H, W), g: (B, F_g, H, W)  (NCHW, like PyTorch)."""
    B, F_l, H, W = x.shape
    F_g = g.shape[1]
    HW = H * W

    # Fold BN into the three 1x1 convs (plain-JAX glue).
    wg, bg = _fold_bn(params["wg_w"], params["wg_b"], params["bn_g_gamma"],
                      params["bn_g_beta"], params["bn_g_mean"], params["bn_g_var"])
    wx, bx = _fold_bn(params["wx_w"], params["wx_b"], params["bn_x_gamma"],
                      params["bn_x_beta"], params["bn_x_mean"], params["bn_x_var"])
    wp, bp = _fold_bn(params["psi_w"], params["psi_b"], params["bn_p_gamma"],
                      params["bn_p_beta"], params["bn_p_mean"], params["bn_p_var"])
    F_int = wg.shape[0]

    # bf16 inputs: carry the conv weights in bf16 too (HBM-bound kernel; MXU
    # still accumulates in f32).  Biases stay f32.
    if x.dtype == jnp.bfloat16:
        wg = wg.astype(jnp.bfloat16)
        wx = wx.astype(jnp.bfloat16)

    elem = jnp.dtype(x.dtype).itemsize
    weight_bytes = 4 * (F_int * (F_g + F_l) + 2 * F_int + 1)

    def vmem_need(ts):
        io = (2 * F_l + F_g) * ts * elem           # x in + out + g in, per tile
        inter = 2 * F_int * ts * 4                 # g1 / x1 / a f32 intermediates
        return 2 * io + inter + weight_bytes       # double-buffered pipeline

    budget_cap = _vmem_budget_cap()

    # --- lane-dense tile selection ------------------------------------------
    ts = min(int(tile_s), pl.cdiv(HW, 128) * 128)
    ts = max(128, (ts // 128) * 128)
    while ts > 128 and vmem_need(ts) > budget_cap:  # fit the VMEM budget
        ts -= 128
    if HW % 128 == 0:                               # prefer no ragged tail
        for cand in range(ts, 127, -128):
            if HW % cand == 0:
                ts = cand
                break
    # v7x megacore: guarantee >= 2 grid steps when possible (B==1, single tile).
    if B * pl.cdiv(HW, ts) < 2 and HW > 128:
        ts = max(128, ((HW - 1) // 128) * 128)

    n_tiles = pl.cdiv(HW, ts)
    grid = (B, n_tiles)

    # Explicit VMEM limit (>= 2x the double-buffered estimate; v5e default
    # scoped limit is only 16 MiB), capped generation-aware.
    est = vmem_need(ts)
    vmem_limit = int(min(max(2 * est, 32 * 1024 * 1024), budget_cap))

    # NCHW -> [B, C, H*W]: pure reshape, no transpose, no padding copy.
    x3 = x.reshape(B, F_l, HW)
    g3 = g.reshape(B, F_g, HW)

    # Kernel-side operand layouts (channels on sublanes, broadcast over lanes).
    b_k = (bg + bx).reshape(F_int, 1)              # single fused branch bias
    wp_k = wp.reshape(F_int, 1)                    # column vector for VPU path
    bp_k = bp.reshape(1).astype(jnp.float32)       # SMEM scalar

    out3 = pl.pallas_call(
        _attention_gate_kernel,
        out_shape=jax.ShapeDtypeStruct((B, F_l, HW), x.dtype),
        grid_spec=pltpu.PrefetchScalarGridSpec(
            num_scalar_prefetch=0,
            grid=grid,
            in_specs=[
                pl.BlockSpec((1, F_l, ts), lambda b, s: (b, 0, s)),   # x tile
                pl.BlockSpec((1, F_g, ts), lambda b, s: (b, 0, s)),   # g tile
                pl.BlockSpec((F_int, F_g), lambda b, s: (0, 0)),      # wg
                pl.BlockSpec((F_int, F_l), lambda b, s: (0, 0)),      # wx
                pl.BlockSpec((F_int, 1),   lambda b, s: (0, 0)),      # bg + bx
                pl.BlockSpec((F_int, 1),   lambda b, s: (0, 0)),      # wpsi
                pl.BlockSpec(memory_space=pltpu.MemorySpace.SMEM),    # bpsi
            ],
            out_specs=pl.BlockSpec((1, F_l, ts), lambda b, s: (b, 0, s)),
        ),
        compiler_params=pltpu.CompilerParams(
            dimension_semantics=("parallel", "parallel"),
            vmem_limit_bytes=vmem_limit),
    )(x3, g3, wg, wx, b_k, wp_k, bp_k)

    return out3.reshape(B, F_l, H, W)


def _reference(x, g, params):
    """Pure-JAX reference of the folded forward pass (for verification)."""
    wg, bg = _fold_bn(params["wg_w"], params["wg_b"], params["bn_g_gamma"],
                      params["bn_g_beta"], params["bn_g_mean"], params["bn_g_var"])
    wx, bx = _fold_bn(params["wx_w"], params["wx_b"], params["bn_x_gamma"],
                      params["bn_x_beta"], params["bn_x_mean"], params["bn_x_var"])
    wp, bp = _fold_bn(params["psi_w"], params["psi_b"], params["bn_p_gamma"],
                      params["bn_p_beta"], params["bn_p_mean"], params["bn_p_var"])
    g1 = jnp.einsum("bchw,oc->bohw", g, wg) + bg[None, :, None, None]
    x1 = jnp.einsum("bchw,oc->bohw", x, wx) + bx[None, :, None, None]
    a = jnp.maximum(g1 + x1, 0.0)
    p = jnp.einsum("bchw,oc->bohw", a, wp) + bp[None, :, None, None]
    p = jax.nn.sigmoid(p)
    return x * p


def _init_params(key, F_g, F_l, F_int):
    ks = jax.random.split(key, 12)
    f32 = jnp.float32
    return {
        # Conv2d(F_g, F_int, 1): weight (F_int, F_g), bias (F_int,)
        "wg_w": jax.random.normal(ks[0], (F_int, F_g), f32) * 0.1,
        "wg_b": jax.random.normal(ks[1], (F_int,), f32) * 0.1,
        "bn_g_gamma": 1.0 + 0.1 * jax.random.normal(ks[2], (F_int,), f32),
        "bn_g_beta": 0.1 * jax.random.normal(ks[3], (F_int,), f32),
        "bn_g_mean": 0.05 * jax.random.normal(ks[4], (F_int,), f32),
        "bn_g_var": jnp.abs(1.0 + 0.1 * jax.random.normal(ks[5], (F_int,), f32)),
        # Conv2d(F_l, F_int, 1)
        "wx_w": jax.random.normal(ks[6], (F_int, F_l), f32) * 0.1,
        "wx_b": jax.random.normal(ks[7], (F_int,), f32) * 0.1,
        "bn_x_gamma": jnp.ones((F_int,), f32),
        "bn_x_beta": jnp.zeros((F_int,), f32),
        "bn_x_mean": jnp.zeros((F_int,), f32),
        "bn_x_var": jnp.ones((F_int,), f32),
        # Conv2d(F_int, 1, 1)
        "psi_w": jax.random.normal(ks[8], (1, F_int), f32) * 0.1,
        "psi_b": jax.random.normal(ks[9], (1,), f32) * 0.1,
        "bn_p_gamma": jnp.ones((1,), f32),
        "bn_p_beta": jnp.zeros((1,), f32),
        "bn_p_mean": jnp.zeros((1,), f32),
        "bn_p_var": jnp.ones((1,), f32),
    }


if __name__ == "__main__":
    key = jax.random.PRNGKey(0)
    kx, kg, kp = jax.random.split(key, 3)

    # Main test: B=2, F_g=F_l=8, F_int=16, 16x16 spatial (HW divisible by 128).
    B, F_g, F_l, F_int, H, W = 2, 8, 8, 16, 16, 16
    x = jax.random.normal(kx, (B, F_l, H, W), jnp.float32)
    g = jax.random.normal(kg, (B, F_g, H, W), jnp.float32)
    params = _init_params(kp, F_g, F_l, F_int)

    out = jax.block_until_ready(attention_gate(x, g, params))
    ref = _reference(x, g, params)
    assert out.shape == (B, F_l, H, W)
    assert jnp.allclose(out, ref, atol=1e-4, rtol=1e-4), "mismatch vs reference"

    # Ragged-spatial test: H*W=100 exercises the Pallas partial edge block
    # (no wrapper-side pad/slice copies).
    H2, W2 = 10, 10
    x2 = jax.random.normal(kx, (B, F_l, H2, W2), jnp.float32)
    g2 = jax.random.normal(kg, (B, F_g, H2, W2), jnp.float32)
    out2 = jax.block_until_ready(attention_gate(x2, g2, params))
    ref2 = _reference(x2, g2, params)
    assert out2.shape == (B, F_l, H2, W2)
    assert jnp.allclose(out2, ref2, atol=1e-4, rtol=1e-4), "mismatch (ragged)"

    # B=1 test: exercises the megacore split path (>= 2 spatial grid steps).
    x3 = jax.random.normal(kx, (1, F_l, H, W), jnp.float32)
    g3 = jax.random.normal(kg, (1, F_g, H, W), jnp.float32)
    out3 = jax.block_until_ready(attention_gate(x3, g3, params))
    ref3 = _reference(x3, g3, params)
    assert out3.shape == (1, F_l, H, W)
    assert jnp.allclose(out3, ref3, atol=1e-4, rtol=1e-4), "mismatch (B=1)"

    print("KERNEL_OK")
</pallas_src>

<mosaic_0001>
module attributes {stable_mosaic.version = 11 : i64} {
  func.func @_attention_gate_kernel(%arg0: i32, %arg1: i32, %arg2: memref<1x8x256xf32, #tpu.memory_space<vmem>>, %arg3: memref<1x8x256xf32, #tpu.memory_space<vmem>>, %arg4: memref<16x8xf32, #tpu.memory_space<vmem>>, %arg5: memref<16x8xf32, #tpu.memory_space<vmem>>, %arg6: memref<16x1xf32, #tpu.memory_space<vmem>>, %arg7: memref<16x1xf32, #tpu.memory_space<vmem>>, %arg8: memref<1xf32, #tpu.memory_space<smem>>, %arg9: memref<1x8x256xf32, #tpu.memory_space<vmem>>) attributes {dimension_semantics = [#tpu.dimension_semantics<parallel>, #tpu.dimension_semantics<parallel>], iteration_bounds = array<i64: 2, 1>, scalar_prefetch = 0 : i64, scratch_operands = 0 : i64, tpu.core_type = #tpu.core_type<tc>, window_params = [{transform_indices = @transform_0, window_bounds = array<i64: 1, 8, 256>}, {transform_indices = @transform_1, window_bounds = array<i64: 1, 8, 256>}, {pipeline_mode = #tpu.pipeline_mode<synchronous>, transform_indices = @transform_2, window_bounds = array<i64: 16, 8>}, {pipeline_mode = #tpu.pipeline_mode<synchronous>, transform_indices = @transform_3, window_bounds = array<i64: 16, 8>}, {pipeline_mode = #tpu.pipeline_mode<synchronous>, transform_indices = @transform_4, window_bounds = array<i64: 16, 1>}, {pipeline_mode = #tpu.pipeline_mode<synchronous>, transform_indices = @transform_5, window_bounds = array<i64: 16, 1>}, {transform_indices = @transform_6, window_bounds = array<i64: 1>}, {transform_indices = @transform_7, window_bounds = array<i64: 1, 8, 256>}]} {
    %c0 = arith.constant 0 : index
    %c0_0 = arith.constant 0 : index
    %c0_1 = arith.constant 0 : index
    %0 = vector.load %arg2[%c0, %c0_0, %c0_1] : memref<1x8x256xf32, #tpu.memory_space<vmem>>, vector<1x8x256xf32>
    %1 = vector.shape_cast %0 : vector<1x8x256xf32> to vector<8x256xf32>
    %c0_2 = arith.constant 0 : index
    %c0_3 = arith.constant 0 : index
    %c0_4 = arith.constant 0 : index
    %2 = vector.load %arg3[%c0_2, %c0_3, %c0_4] : memref<1x8x256xf32, #tpu.memory_space<vmem>>, vector<1x8x256xf32>
    %3 = vector.shape_cast %2 : vector<1x8x256xf32> to vector<8x256xf32>
    %c0_5 = arith.constant 0 : index
    %c0_6 = arith.constant 0 : index
    %4 = vector.load %arg4[%c0_5, %c0_6] : memref<16x8xf32, #tpu.memory_space<vmem>>, vector<16x8xf32>
    %cst = arith.constant dense<0.000000e+00> : vector<16x256xf32>
    %5 = tpu.matmul %4, %3, %cst {dimension_numbers = #tpu.dot_dimension_numbers<[1], [0], [0], [1], [0, 0, 1, 1], [], []>} : vector<16x8xf32>, vector<8x256xf32>, vector<16x256xf32> -> vector<16x256xf32>
    %c0_7 = arith.constant 0 : index
    %c0_8 = arith.constant 0 : index
    %6 = vector.load %arg5[%c0_7, %c0_8] : memref<16x8xf32, #tpu.memory_space<vmem>>, vector<16x8xf32>
    %cst_9 = arith.constant dense<0.000000e+00> : vector<16x256xf32>
    %7 = tpu.matmul %6, %1, %cst_9 {dimension_numbers = #tpu.dot_dimension_numbers<[1], [0], [0], [1], [0, 0, 1, 1], [], []>} : vector<16x8xf32>, vector<8x256xf32>, vector<16x256xf32> -> vector<16x256xf32>
    %8 = arith.addf %5, %7 : vector<16x256xf32>
    %c0_10 = arith.constant 0 : index
    %c0_11 = arith.constant 0 : index
    %9 = vector.load %arg6[%c0_10, %c0_11] : memref<16x1xf32, #tpu.memory_space<vmem>>, vector<16x1xf32>
    %10 = vector.broadcast %9 : vector<16x1xf32> to vector<16x256xf32>
    %11 = arith.addf %8, %10 : vector<16x256xf32>
    %cst_12 = arith.constant 0.000000e+00 : f32
    %12 = vector.broadcast %cst_12 : f32 to vector<16x256xf32>
    %13 = arith.maximumf %11, %12 : vector<16x256xf32>
    %c0_13 = arith.constant 0 : index
    %c0_14 = arith.constant 0 : index
    %14 = vector.load %arg7[%c0_13, %c0_14] : memref<16x1xf32, #tpu.memory_space<vmem>>, vector<16x1xf32>
    %15 = vector.broadcast %14 : vector<16x1xf32> to vector<16x256xf32>
    %16 = arith.mulf %13, %15 : vector<16x256xf32>
    %cst_15 = arith.constant dense<0.000000e+00> : vector<256xf32>
    %17 = vector.multi_reduction <add>, %16, %cst_15 [0] : vector<16x256xf32> to vector<256xf32>
    %18 = vector.shape_cast %17 : vector<256xf32> to vector<1x256xf32>
    %c0_16 = arith.constant 0 : index
    %19 = memref.load %arg8[%c0_16] : memref<1xf32, #tpu.memory_space<smem>>
    %20 = vector.broadcast %19 : f32 to vector<1x256xf32>
    %21 = arith.addf %18, %20 : vector<1x256xf32>
    %22 = arith.negf %21 : vector<1x256xf32>
    %23 = math.exp %22 : vector<1x256xf32>
    %cst_17 = arith.constant 1.000000e+00 : f32
    %24 = vector.broadcast %cst_17 : f32 to vector<1x256xf32>
    %25 = arith.addf %24, %23 : vector<1x256xf32>
    %26 = arith.divf %24, %25 : vector<1x256xf32>
    %27 = vector.broadcast %26 : vector<1x256xf32> to vector<8x256xf32>
    %28 = arith.mulf %1, %27 : vector<8x256xf32>
    %c0_18 = arith.constant 0 : index
    %c0_19 = arith.constant 0 : index
    %c0_20 = arith.constant 0 : index
    %29 = vector.load %arg9[%c0_18, %c0_19, %c0_20] : memref<1x8x256xf32, #tpu.memory_space<vmem>>, vector<1x8x256xf32>
    %30 = vector.shape_cast %29 : vector<1x8x256xf32> to vector<8x256xf32>
    %31 = vector.shape_cast %28 : vector<8x256xf32> to vector<1x8x256xf32>
    tpu.vector_store %arg9[%c0_18, %c0_19, %c0_20], %31 {strides = array<i32>} : memref<1x8x256xf32, #tpu.memory_space<vmem>>, vector<1x8x256xf32>,
    return
  }
  func.func @transform_0(%arg0: i32, %arg1: i32) -> (i32, i32, i32) {
    %c0_i32 = arith.constant 0 : i32
    %c0_i32_0 = arith.constant 0 : i32
    return %arg0, %c0_i32, %arg1 : i32, i32, i32
  }
  func.func @transform_1(%arg0: i32, %arg1: i32) -> (i32, i32, i32) {
    %c0_i32 = arith.constant 0 : i32
    %c0_i32_0 = arith.constant 0 : i32
    return %arg0, %c0_i32, %arg1 : i32, i32, i32
  }
  func.func @transform_2(%arg0: i32, %arg1: i32) -> (i32, i32) {
    %c0_i32 = arith.constant 0 : i32
    %c0_i32_0 = arith.constant 0 : i32
    %c0_i32_1 = arith.constant 0 : i32
    return %c0_i32, %c0_i32_0 : i32, i32
  }
  func.func @transform_3(%arg0: i32, %arg1: i32) -> (i32, i32) {
    %c0_i32 = arith.constant 0 : i32
    %c0_i32_0 = arith.constant 0 : i32
    %c0_i32_1 = arith.constant 0 : i32
    return %c0_i32, %c0_i32_0 : i32, i32
  }
  func.func @transform_4(%arg0: i32, %arg1: i32) -> (i32, i32) {
    %c0_i32 = arith.constant 0 : i32
    %c0_i32_0 = arith.constant 0 : i32
    %c0_i32_1 = arith.constant 0 : i32
    return %c0_i32, %c0_i32_0 : i32, i32
  }
  func.func @transform_5(%arg0: i32, %arg1: i32) -> (i32, i32) {
    %c0_i32 = arith.constant 0 : i32
    %c0_i32_0 = arith.constant 0 : i32
    %c0_i32_1 = arith.constant 0 : i32
    return %c0_i32, %c0_i32_0 : i32, i32
  }
  func.func @transform_6(%arg0: i32, %arg1: i32) -> i32 {
    %c0_i32 = arith.constant 0 : i32
    %c0_i32_0 = arith.constant 0 : i32
    return %c0_i32 : i32
  }
  func.func @transform_7(%arg0: i32, %arg1: i32) -> (i32, i32, i32) {
    %c0_i32 = arith.constant 0 : i32
    %c0_i32_0 = arith.constant 0 : i32
    return %arg0, %c0_i32, %arg1 : i32, i32, i32
  }
}

</mosaic_0001>

<llo_original>
// kernel: tpu_custom_call.1
$region0: #{tpu_custom_call.1}
  #allocation0 [shape = 'u32[]', space=smem, size = 0x4, offset = 0x4, fixed_abs, tag = 'smem constant byte address 0x4 - core index']
  #allocation1 [shape = 'u32[144,128]{1,0:T(1,128)}', space=vmem, size = 0x12000, scoped, tag = 'internal scratch']
  #allocation2 [shape = 'f32[1]{0:T(128)S(6)}', space=smem, size = 0x200, scoped, tag = 'scoped memory for tpu_custom_call.1']
  %s0 = inlined_call_operand.vmem [shape: f32[2,8,256], index: 0, kind: input, shape index: {}]
  %s1 = inlined_call_operand.vmem [shape: f32[2,8,256], index: 1, kind: input, shape index: {}]
  %s2 = inlined_call_operand.vmem [shape: f32[16,8], index: 2, kind: input, shape index: {}]
  %s3 = inlined_call_operand.vmem [shape: f32[16,8], index: 3, kind: input, shape index: {}]
  %s4 = inlined_call_operand.vmem [shape: f32[16,1], index: 4, kind: input, shape index: {}]
  %s5 = inlined_call_operand.vmem [shape: f32[16,1], index: 5, kind: input, shape index: {}]
  %s6 = inlined_call_operand.<no memory space> [shape: f32[1], index: 6, kind: input, shape index: {}]
  %s7 = inlined_call_operand.hbm [shape: f32[2,8,256], index: 7, kind: output, shape index: {}]
  %s8 = sld [smem:[#allocation0]]
  $region61: #{tpu_custom_call.1} parent=0
    _
  %s10 = ssub.s32 1, %s8
  %s11 = scalar_select 0, %s10, %s8
  %12 = sst [smem:[#allocation2]] %s6
  $region1: #{tpu_custom_call.1} parent=0
    #allocation3 [shape = 'u8[16384]{0}', space=vmem, size = 0x4000, scoped, tag = 'output window, operand 0']
    #allocation4 [shape = 's32[2]{0}', space=sflag, size = 0x8, scoped, tag = 'scoped memory for tpu_custom_call.1']
    %13 = vsyncpa [#allocation4], 0
    %s14 = scalar_lea.sflag [#allocation4], 1
    %15 = vsyncpa %s14, 0
    loop: start=0, step=1, limit=4
    $region2: #{tpu_custom_call.1} parent=1 // loop_pre_header
      _
    $region3: #{tpu_custom_call.1} parent=1 // loop_header
      %s17 = sphi 0, %s21
      %p18 = scmp.ge.s32.totalorder %s17, 4
      %s24 = sphi 0, %s36
      %s25 = sphi 0, %s32
      %s26 = sphi 0, %s24
      %s27 = sphi 0, %s25
      %s28 = sphi 0, %s26
      %s29 = sphi 0, %s27
      %s41 = sphi 0, %s43
      %s44 = sphi 0, %s41
      %s45 = sphi 0, %s44
      %s61 = sphi 0, %s45
      %s69 = sphi 0, %s71
      %s72 = sphi 0, %s69
      %s73 = sphi 0, %s72
      %s89 = sphi 0, %s73
      %s93 = sphi 0, %s93
      %s95 = sphi 0, %s93
      %s96 = sphi 0, %s95
      %s110 = sphi 0, %s96
      %s114 = sphi 0, %s114
      %s116 = sphi 0, %s114
      %s117 = sphi 0, %s116
      %s131 = sphi 0, %s117
      %s135 = sphi 0, %s135
      %s137 = sphi 0, %s135
      %s138 = sphi 0, %s137
      %s152 = sphi 0, %s138
      %s156 = sphi 0, %s156
      %s158 = sphi 0, %s156
      %s159 = sphi 0, %s158
      %s173 = sphi 0, %s159
      %s177 = sphi 0, %s177
      %s179 = sphi 0, %s177
      %s180 = sphi 0, %s179
      %s194 = sphi 0, %s180
      %s202 = sphi 0, %s204
      %s205 = sphi 0, %s202
      %s206 = sphi 0, %s205
      %s222 = sphi 0, %s206
    $region4: #{tpu_custom_call.1} parent=1 // loop_header_branch
      %20 = sbr.rel (%p18) target = $region8
    $region5: #{tpu_custom_call.1} parent=1 // loop_body
      %s22 = ssub.s32 %s17, 1
      %s23 = ssub.s32 %s17, 2
      %s30 = sadd.s32 1, %s25
      %p31 = scmp.ge.s32.totalorder %s30, 1
      %s32 = scalar_select %p31, 0, %s30
      %s33 = sadd.s32 1, %s24
      %s34 = scalar_select %p31, %s33, %s24
      %p35 = scmp.ge.s32.totalorder %s34, 2
      %s36 = scalar_select %p35, 0, %s34
      %s37 = ssub.s32 %s24, %s36
      %s38 = ssub.s32 %s25, %s32
      %s39 = sor.u32 %s37, %s38
      %p40 = scmp.eq.s32.totalorder %s39, 0
      %s42 = sadd.s32 %s41, 1
      %s43 = scalar_select %p40, %s41, %s42
      %p46 = pneg %p40
      %p47 = scmp.eq.s32.totalorder %s17, 1
      %p48 = por %p46, %p47
      %p49 = scmp.ne.s32.totalorder %s41, %s44
      %p50 = scmp.eq.s32.totalorder %s17, 0
      %p51 = por %p49, %p50
      %p52 = scmp.ne.s32.totalorder %s41, %s44
      %p53 = scmp.eq.s32.totalorder %s22, 1
      %p54 = por %p52, %p53
      %p55 = scmp.ne.s32.totalorder %s44, %s45
      %p56 = scmp.eq.s32.totalorder %s22, 0
      %p57 = por %p55, %p56
      %p58 = scmp.ne.s32.totalorder %s44, %s45
      %p59 = scmp.eq.s32.totalorder %s23, 1
      %p60 = por %p58, %p59
      %p62 = scmp.ne.s32.totalorder %s45, %s61
      %p63 = scmp.eq.s32.totalorder %s23, 0
      %p64 = por %p62, %p63
      %s65 = ssub.s32 %s24, %s36
      %s66 = ssub.s32 %s25, %s32
      %s67 = sor.u32 %s65, %s66
      %p68 = scmp.eq.s32.totalorder %s67, 0
      %s70 = sadd.s32 %s69, 1
      %s71 = scalar_select %p68, %s69, %s70
      %p74 = pneg %p68
      %p75 = scmp.eq.s32.totalorder %s17, 1
      %p76 = por %p74, %p75
      %p77 = scmp.ne.s32.totalorder %s69, %s72
      %p78 = scmp.eq.s32.totalorder %s17, 0
      %p79 = por %p77, %p78
      %p80 = scmp.ne.s32.totalorder %s69, %s72
      %p81 = scmp.eq.s32.totalorder %s22, 1
      %p82 = por %p80, %p81
      %p83 = scmp.ne.s32.totalorder %s72, %s73
      %p84 = scmp.eq.s32.totalorder %s22, 0
      %p85 = por %p83, %p84
      %p86 = scmp.ne.s32.totalorder %s72, %s73
      %p87 = scmp.eq.s32.totalorder %s23, 1
      %p88 = por %p86, %p87
      %p90 = scmp.ne.s32.totalorder %s73, %s89
      %p91 = scmp.eq.s32.totalorder %s23, 0
      %p92 = por %p90, %p91
      %s94 = sadd.s32 %s93, 1
      %p97 = scmp.eq.s32.totalorder %s17, 1
      %p98 = scmp.ne.s32.totalorder %s93, %s95
      %p99 = scmp.eq.s32.totalorder %s17, 0
      %p100 = por %p98, %p99
      %p101 = scmp.ne.s32.totalorder %s93, %s95
      %p102 = scmp.eq.s32.totalorder %s22, 1
      %p103 = por %p101, %p102
      %p104 = scmp.ne.s32.totalorder %s95, %s96
      %p105 = scmp.eq.s32.totalorder %s22, 0
      %p106 = por %p104, %p105
      %p107 = scmp.ne.s32.totalorder %s95, %s96
      %p108 = scmp.eq.s32.totalorder %s23, 1
      %p109 = por %p107, %p108
      %p111 = scmp.ne.s32.totalorder %s96, %s110
      %p112 = scmp.eq.s32.totalorder %s23, 0
      %p113 = por %p111, %p112
      %s115 = sadd.s32 %s114, 1
      %p118 = scmp.eq.s32.totalorder %s17, 1
      %p119 = scmp.ne.s32.totalorder %s114, %s116
      %p120 = scmp.eq.s32.totalorder %s17, 0
      %p121 = por %p119, %p120
      %p122 = scmp.ne.s32.totalorder %s114, %s116
      %p123 = scmp.eq.s32.totalorder %s22, 1
      %p124 = por %p122, %p123
      %p125 = scmp.ne.s32.totalorder %s116, %s117
      %p126 = scmp.eq.s32.totalorder %s22, 0
      %p127 = por %p125, %p126
      %p128 = scmp.ne.s32.totalorder %s116, %s117
      %p129 = scmp.eq.s32.totalorder %s23, 1
      %p130 = por %p128, %p129
      %p132 = scmp.ne.s32.totalorder %s117, %s131
      %p133 = scmp.eq.s32.totalorder %s23, 0
      %p134 = por %p132, %p133
      %s136 = sadd.s32 %s135, 1
      %p139 = scmp.eq.s32.totalorder %s17, 1
      %p140 = scmp.ne.s32.totalorder %s135, %s137
      %p141 = scmp.eq.s32.totalorder %s17, 0
      %p142 = por %p140, %p141
      %p143 = scmp.ne.s32.totalorder %s135, %s137
      %p144 = scmp.eq.s32.totalorder %s22, 1
      %p145 = por %p143, %p144
      %p146 = scmp.ne.s32.totalorder %s137, %s138
      %p147 = scmp.eq.s32.totalorder %s22, 0
      %p148 = por %p146, %p147
      %p149 = scmp.ne.s32.totalorder %s137, %s138
      %p150 = scmp.eq.s32.totalorder %s23, 1
      %p151 = por %p149, %p150
      %p153 = scmp.ne.s32.totalorder %s138, %s152
      %p154 = scmp.eq.s32.totalorder %s23, 0
      %p155 = por %p153, %p154
      %s157 = sadd.s32 %s156, 1
      %p160 = scmp.eq.s32.totalorder %s17, 1
      %p161 = scmp.ne.s32.totalorder %s156, %s158
      %p162 = scmp.eq.s32.totalorder %s17, 0
      %p163 = por %p161, %p162
      %p164 = scmp.ne.s32.totalorder %s156, %s158
      %p165 = scmp.eq.s32.totalorder %s22, 1
      %p166 = por %p164, %p165
      %p167 = scmp.ne.s32.totalorder %s158, %s159
      %p168 = scmp.eq.s32.totalorder %s22, 0
      %p169 = por %p167, %p168
      %p170 = scmp.ne.s32.totalorder %s158, %s159
      %p171 = scmp.eq.s32.totalorder %s23, 1
      %p172 = por %p170, %p171
      %p174 = scmp.ne.s32.totalorder %s159, %s173
      %p175 = scmp.eq.s32.totalorder %s23, 0
      %p176 = por %p174, %p175
      %s178 = sadd.s32 %s177, 1
      %p181 = scmp.eq.s32.totalorder %s17, 1
      %p182 = scmp.ne.s32.totalorder %s177, %s179
      %p183 = scmp.eq.s32.totalorder %s17, 0
      %p184 = por %p182, %p183
      %p185 = scmp.ne.s32.totalorder %s177, %s179
      %p186 = scmp.eq.s32.totalorder %s22, 1
      %p187 = por %p185, %p186
      %p188 = scmp.ne.s32.totalorder %s179, %s180
      %p189 = scmp.eq.s32.totalorder %s22, 0
      %p190 = por %p188, %p189
      %p191 = scmp.ne.s32.totalorder %s179, %s180
      %p192 = scmp.eq.s32.totalorder %s23, 1
      %p193 = por %p191, %p192
      %p195 = scmp.ne.s32.totalorder %s180, %s194
      %p196 = scmp.eq.s32.totalorder %s23, 0
      %p197 = por %p195, %p196
      %s198 = ssub.s32 %s24, %s36
      %s199 = ssub.s32 %s25, %s32
      %s200 = sor.u32 %s198, %s199
      %p201 = scmp.eq.s32.totalorder %s200, 0
      %s203 = sadd.s32 %s202, 1
      %s204 = scalar_select %p201, %s202, %s203
      %p207 = pneg %p201
      %p208 = scmp.eq.s32.totalorder %s17, 1
      %p209 = por %p207, %p208
      %p210 = scmp.ne.s32.totalorder %s202, %s205
      %p211 = scmp.eq.s32.totalorder %s17, 0
      %p212 = por %p210, %p211
      %p213 = scmp.ne.s32.totalorder %s202, %s205
      %p214 = scmp.eq.s32.totalorder %s22, 1
      %p215 = por %p213, %p214
      %p216 = scmp.ne.s32.totalorder %s205, %s206
      %p217 = scmp.eq.s32.totalorder %s22, 0
      %p218 = por %p216, %p217
      %p219 = scmp.ne.s32.totalorder %s205, %s206
      %p220 = scmp.eq.s32.totalorder %s23, 1
      %p221 = por %p219, %p220
      %p223 = scmp.ne.s32.totalorder %s206, %s222
      %p224 = scmp.eq.s32.totalorder %s23, 0
      %p225 = por %p223, %p224
      %p226 = scmp.le.s32.totalorder 1, %s17
      %p227 = scmp.lt.s32.totalorder %s17, 3
      %p228 = pnand %p226, %p227
      %p229 = pneg %p228
      // Predicated region
      $region9: #{tpu_custom_call.1} parent=5 // pred_check
        _
      $region10: #{tpu_custom_call.1} parent=5 // pred_check_branch
        %231 = sbr.rel (%p228) target = $region12
      $region11: #{tpu_custom_call.1} parent=5 // pred_region
        %s232 = ssub.s32 %s17, 1
        // Predicated region
        $region13: #{tpu_custom_call.1} parent=11 // pred_check
          %p233 = pneg %p106
        $region14: #{tpu_custom_call.1} parent=11 // pred_check_branch
          %235 = sbr.rel (%p233) target = $region16
        $region15: #{tpu_custom_call.1} parent=11 // pred_region
          _
        $region16: #{tpu_custom_call.1} parent=11 // pred_fallthru
          _
        // Predicated region
        $region17: #{tpu_custom_call.1} parent=11 // pred_check
          %p236 = pneg %p127
        $region18: #{tpu_custom_call.1} parent=11 // pred_check_branch
          %238 = sbr.rel (%p236) target = $region20
        $region19: #{tpu_custom_call.1} parent=11 // pred_region
          _
        $region20: #{tpu_custom_call.1} parent=11 // pred_fallthru
          _
        // Predicated region
        $region21: #{tpu_custom_call.1} parent=11 // pred_check
          %p239 = pneg %p148
        $region22: #{tpu_custom_call.1} parent=11 // pred_check_branch
          %241 = sbr.rel (%p239) target = $region24
        $region23: #{tpu_custom_call.1} parent=11 // pred_region
          _
        $region24: #{tpu_custom_call.1} parent=11 // pred_fallthru
          _
        // Predicated region
        $region25: #{tpu_custom_call.1} parent=11 // pred_check
          %p242 = pneg %p169
        $region26: #{tpu_custom_call.1} parent=11 // pred_check_branch
          %244 = sbr.rel (%p242) target = $region28
        $region27: #{tpu_custom_call.1} parent=11 // pred_region
          _
        $region28: #{tpu_custom_call.1} parent=11 // pred_fallthru
          _
        // Predicated region
        $region29: #{tpu_custom_call.1} parent=11 // pred_check
          %p245 = pneg %p190
        $region30: #{tpu_custom_call.1} parent=11 // pred_check_branch
          %247 = sbr.rel (%p245) target = $region32
        $region31: #{tpu_custom_call.1} parent=11 // pred_region
          _
        $region32: #{tpu_custom_call.1} parent=11 // pred_fallthru
          _
      $region12: #{tpu_custom_call.1} parent=5 // pred_fallthru
        _
      %p248 = scmp.lt.s32.totalorder %s17, 2
      // Predicated region
      $region33: #{tpu_custom_call.1} parent=5 // pred_check
        %p249 = pneg %p248
      $region34: #{tpu_custom_call.1} parent=5 // pred_check_branch
        %251 = sbr.rel (%p249) target = $region36
      $region35: #{tpu_custom_call.1} parent=5 // pred_region
        // Predicated region
        $region37: #{tpu_custom_call.1} parent=35 // pred_check
          %p252 = pneg %p51
        $region38: #{tpu_custom_call.1} parent=35 // pred_check_branch
          %254 = sbr.rel (%p252) target = $region40
        $region39: #{tpu_custom_call.1} parent=35 // pred_region
          %s255 = smul.u32 2, %s25
          %p256 = scmp.lt.s32.totalorder %s24, 1
          %s257 = scalar_select %p256, %s24, 1
          %p258 = scmp.lt.s32.totalorder %s255, 1
          %s259 = scalar_select %p258, %s255, 1
          %s260 = smul.addr %s257, 2
          %s261 = sadd.s32 %s259, %s260
          %s262 = smul.addr %s261, 8
          %s263 = scalar_lea.vmem %s0, %s262
          %s264 = smul.u32 2, %s25
        $region40: #{tpu_custom_call.1} parent=35 // pred_fallthru
          _
        // Predicated region
        $region41: #{tpu_custom_call.1} parent=35 // pred_check
          %p265 = pneg %p79
        $region42: #{tpu_custom_call.1} parent=35 // pred_check_branch
          %267 = sbr.rel (%p265) target = $region44
        $region43: #{tpu_custom_call.1} parent=35 // pred_region
          %s268 = smul.u32 2, %s25
          %p269 = scmp.lt.s32.totalorder %s24, 1
          %s270 = scalar_select %p269, %s24, 1
          %p271 = scmp.lt.s32.totalorder %s268, 1
          %s272 = scalar_select %p271, %s268, 1
          %s273 = smul.addr %s270, 2
          %s274 = sadd.s32 %s272, %s273
          %s275 = smul.addr %s274, 8
          %s276 = scalar_lea.vmem %s1, %s275
          %s277 = smul.u32 2, %s25
        $region44: #{tpu_custom_call.1} parent=35 // pred_fallthru
          _
      $region36: #{tpu_custom_call.1} parent=5 // pred_fallthru
        _
      %p278 = scmp.le.s32.totalorder 1, %s17
      %p279 = scmp.lt.s32.totalorder %s17, 3
      %p280 = pnand %p278, %p279
      %p281 = pneg %p280
      // Predicated region
      $region45: #{tpu_custom_call.1} parent=5 // pred_check
        _
      $region46: #{tpu_custom_call.1} parent=5 // pred_check_branch
        %283 = sbr.rel (%p280) target = $region48
      $region47: #{tpu_custom_call.1} parent=5 // pred_region
        %s284 = ssub.s32 %s17, 1
        %s285 = smul.u32 2, %s27
        %p286 = scmp.lt.s32.totalorder %s26, 1
        %s287 = scalar_select %p286, %s26, 1
        %p288 = scmp.lt.s32.totalorder %s285, 1
        %s289 = scalar_select %p288, %s285, 1
        %s290 = smul.addr %s287, 2
        %s291 = sadd.s32 %s289, %s290
        %s292 = smul.addr %s291, 8
        %s293 = scalar_lea.vmem %s0, %s292
        %p294 = pneg %p57
        %p295 = pneg %p54
        %s296 = smul.u32 2, %s27
        %p297 = scmp.lt.s32.totalorder %s26, 1
        %s298 = scalar_select %p297, %s26, 1
        %p299 = scmp.lt.s32.totalorder %s296, 1
        %s300 = scalar_select %p299, %s296, 1
        %s301 = smul.addr %s298, 2
        %s302 = sadd.s32 %s300, %s301
        %s303 = smul.addr %s302, 8
        %s304 = scalar_lea.vmem %s1, %s303
        %p305 = pneg %p85
        %p306 = pneg %p82
        %p307 = pneg %p106
        %p308 = pneg %p103
        %p309 = pneg %p127
        %p310 = pneg %p124
        %p311 = pneg %p148
        %p312 = pneg %p145
        %p313 = pneg %p169
        %p314 = pneg %p166
        %p315 = pneg %p190
        %p316 = pneg %p187
        %p317 = pneg %p218
        %p318 = pneg %p215
        %s319 = sand.u32 %s205, 1
        %s320 = scalar_lea.sflag [#allocation4], %s319
        %s321 = sand.u32 %s205, 1
        %s322 = smul.addr %s321, 16
        %s323 = scalar_lea.vmem [#allocation3], %s322
        %s324 = smul.u32 2, %s27
        %p325 = scmp.lt.s32.totalorder %s26, 1
        %s326 = scalar_select %p325, %s26, 1
        %p327 = scmp.lt.s32.totalorder %s324, 1
        %s328 = scalar_select %p327, %s324, 1
        %s329 = smul.addr %s326, 2
        %s330 = sadd.s32 %s328, %s329
        %s331 = smul.addr %s330, 8
        %s332 = scalar_lea.vmem %s0, %s331
        %s333 = smul.u32 2, %s27
        %s334 = smul.u32 2, %s27
        %p335 = scmp.lt.s32.totalorder %s26, 1
        %s336 = scalar_select %p335, %s26, 1
        %p337 = scmp.lt.s32.totalorder %s334, 1
        %s338 = scalar_select %p337, %s334, 1
        %s339 = smul.addr %s336, 2
        %s340 = sadd.s32 %s338, %s339
        %s341 = smul.addr %s340, 8
        %s342 = scalar_lea.vmem %s1, %s341
        %s343 = smul.u32 2, %s27
        %s344 = smul.u32 2, %s27
        %v345 = vld [vmem:[%s332] sm:$0xff]
        %v346 = vld [vmem:[%s332 + $0x8] sm:$0xff]
        %v347 = vld [vmem:[%s342] sm:$0xff]
        %v348 = vld [vmem:[%s342 + $0x8] sm:$0xff]
        %v349 = vld [vmem:[%s2] sm:$0xff]
        %v350 = vld [vmem:[%s2 + $0x8] sm:$0xff]
        %v351 = vld [vmem:[%s3] sm:$0xff]
        %v352 = vld [vmem:[%s3 + $0x8] sm:$0xff]
        %vm353 = vcmask 64512
        %v355 = vsel %vm353, %v351, 0
        %v358 = vsel %vm353, %v352, 0
        %360 = vmatprep.subr.mxu0 %v346
        %361 = vmatpush1.msra.mxu0 %v345
        %362 = vmatprep.subr.mxu0 0.0
        %363 = vmatpush1.msra.mxu0 0.0
        %364 = vmatprep.subr.mxu0 0.0
        %365 = vmatpush1.msra.mxu0 0.0
        %366 = vmatprep.subr.mxu0 0.0
        %367 = vmatpush1.msra.mxu0 0.0
        %368 = vmatprep.subr.mxu0 0.0
        %369 = vmatpush1.msra.mxu0 0.0
        %370 = vmatprep.subr.mxu0 0.0
        %371 = vmatpush1.msra.mxu0 0.0
        %372 = vmatprep.subr.mxu0 0.0
        %373 = vmatpush1.msra.mxu0 0.0
        %374 = vmatprep.subr.mxu0 0.0
        %375 = vmatpush1.msra.mxu0 0.0
        %376 = vmatprep.subr.mxu0 0.0
        %377 = vmatpush1.msra.mxu0 0.0
        %378 = vmatprep.subr.mxu0 0.0
        %379 = vmatpush1.msra.mxu0 0.0
        %380 = vmatprep.subr.mxu0 0.0
        %381 = vmatpush1.msra.mxu0 0.0
        %382 = vmatprep.subr.mxu0 0.0
        %383 = vmatpush1.msra.mxu0 0.0
        %384 = vmatprep.subr.mxu0 0.0
        %385 = vmatpush1.msra.mxu0 0.0
        %386 = vmatprep.subr.mxu0 0.0
        %387 = vmatpush1.msra.mxu0 0.0
        %388 = vmatprep.subr.mxu0 0.0
        %389 = vmatpush1.msra.mxu0 0.0
        %390 = vmatprep.subr.mxu0 0.0
        %391 = vmatpush1.msra.mxu0 0.0
        %392 = vmatprep.subr.mxu0 0.0
        %393 = vmatpush1.msra.mxu0 0.0
        %394 = vmatprep.subr.mxu0 0.0
        %395 = vmatpush1.msra.mxu0 0.0
        %396 = vmatprep.subr.mxu0 0.0
        %397 = vmatpush1.msra.mxu0 0.0
        %398 = vmatprep.subr.mxu0 0.0
        %399 = vmatpush1.msra.mxu0 0.0
        %400 = vmatprep.subr.mxu0 0.0
        %401 = vmatpush1.msra.mxu0 0.0
        %402 = vmatprep.subr.mxu0 0.0
        %403 = vmatpush1.msra.mxu0 0.0
        %404 = vmatprep.subr.mxu0 0.0
        %405 = vmatpush1.msra.mxu0 0.0
        %406 = vmatprep.subr.mxu0 0.0
        %407 = vmatpush1.msra.mxu0 0.0
        %408 = vmatprep.subr.mxu0 0.0
        %409 = vmatpush1.msra.mxu0 0.0
        %410 = vmatprep.subr.mxu0 0.0
        %411 = vmatpush1.msra.mxu0 0.0
        %412 = vmatprep.subr.mxu0 0.0
        %413 = vmatpush1.msra.mxu0 0.0
        %414 = vmatprep.subr.mxu0 0.0
        %415 = vmatpush1.msra.mxu0 0.0
        %416 = vmatprep.subr.mxu0 0.0
        %417 = vmatpush1.msra.mxu0 0.0
        %418 = vmatprep.subr.mxu0 0.0
        %419 = vmatpush1.msra.mxu0 0.0
        %420 = vmatprep.subr.mxu0 0.0
        %421 = vmatpush1.msra.mxu0 0.0
        %422 = vmatprep.subr.mxu0 0.0
        %423 = vmatpush1.msra.mxu0 0.0
        %424 = vmatprep.mubr.f32.mxu0 0.0
        %425 = vmatmul.mubr.f32.gmra.mrb[0].mxu0 %v355
        %v426 = vpop.f32.mrb[0].mxu0
        %v427 = vadd.f32 0.0, %v426
        %v428 = vpop.f32.mrb[0].mxu0
        %v429 = vadd.f32 0.0, %v428
        %430 = vmatprep.mubr.f32.mxu0 0.0
        %431 = vmatmul.mubr.f32.gmra.mrb[0].mxu0 %v358
        %v432 = vpop.f32.mrb[0].mxu0
        %v433 = vadd.f32 0.0, %v432
        %v434 = vpop.f32.mrb[0].mxu0
        %v435 = vadd.f32 0.0, %v434
        %436 = vdwg.mxu0
        %v438 = vsel %vm353, %v349, 0
        %v441 = vsel %vm353, %v350, 0
        %443 = vmatprep.subr.mxu0 %v348
        %444 = vmatpush1.msra.mxu0 %v347
        %445 = vmatprep.subr.mxu0 0.0
        %446 = vmatpush1.msra.mxu0 0.0
        %447 = vmatprep.subr.mxu0 0.0
        %448 = vmatpush1.msra.mxu0 0.0
        %449 = vmatprep.subr.mxu0 0.0
        %450 = vmatpush1.msra.mxu0 0.0
        %451 = vmatprep.subr.mxu0 0.0
        %452 = vmatpush1.msra.mxu0 0.0
        %453 = vmatprep.subr.mxu0 0.0
        %454 = vmatpush1.msra.mxu0 0.0
        %455 = vmatprep.subr.mxu0 0.0
        %456 = vmatpush1.msra.mxu0 0.0
        %457 = vmatprep.subr.mxu0 0.0
        %458 = vmatpush1.msra.mxu0 0.0
        %459 = vmatprep.subr.mxu0 0.0
        %460 = vmatpush1.msra.mxu0 0.0
        %461 = vmatprep.subr.mxu0 0.0
        %462 = vmatpush1.msra.mxu0 0.0
        %463 = vmatprep.subr.mxu0 0.0
        %464 = vmatpush1.msra.mxu0 0.0
        %465 = vmatprep.subr.mxu0 0.0
        %466 = vmatpush1.msra.mxu0 0.0
        %467 = vmatprep.subr.mxu0 0.0
        %468 = vmatpush1.msra.mxu0 0.0
        %469 = vmatprep.subr.mxu0 0.0
        %470 = vmatpush1.msra.mxu0 0.0
        %471 = vmatprep.subr.mxu0 0.0
        %472 = vmatpush1.msra.mxu0 0.0
        %473 = vmatprep.subr.mxu0 0.0
        %474 = vmatpush1.msra.mxu0 0.0
        %475 = vmatprep.subr.mxu0 0.0
        %476 = vmatpush1.msra.mxu0 0.0
        %477 = vmatprep.subr.mxu0 0.0
        %478 = vmatpush1.msra.mxu0 0.0
        %479 = vmatprep.subr.mxu0 0.0
        %480 = vmatpush1.msra.mxu0 0.0
        %481 = vmatprep.subr.mxu0 0.0
        %482 = vmatpush1.msra.mxu0 0.0
        %483 = vmatprep.subr.mxu0 0.0
        %484 = vmatpush1.msra.mxu0 0.0
        %485 = vmatprep.subr.mxu0 0.0
        %486 = vmatpush1.msra.mxu0 0.0
        %487 = vmatprep.subr.mxu0 0.0
        %488 = vmatpush1.msra.mxu0 0.0
        %489 = vmatprep.subr.mxu0 0.0
        %490 = vmatpush1.msra.mxu0 0.0
        %491 = vmatprep.subr.mxu0 0.0
        %492 = vmatpush1.msra.mxu0 0.0
        %493 = vmatprep.subr.mxu0 0.0
        %494 = vmatpush1.msra.mxu0 0.0
        %495 = vmatprep.subr.mxu0 0.0
        %496 = vmatpush1.msra.mxu0 0.0
        %497 = vmatprep.subr.mxu0 0.0
        %498 = vmatpush1.msra.mxu0 0.0
        %499 = vmatprep.subr.mxu0 0.0
        %500 = vmatpush1.msra.mxu0 0.0
        %501 = vmatprep.subr.mxu0 0.0
        %502 = vmatpush1.msra.mxu0 0.0
        %503 = vmatprep.subr.mxu0 0.0
        %504 = vmatpush1.msra.mxu0 0.0
        %505 = vmatprep.subr.mxu0 0.0
        %506 = vmatpush1.msra.mxu0 0.0
        %507 = vmatprep.mubr.f32.mxu0 0.0
        %508 = vmatmul.mubr.f32.gmra.mrb[0].mxu0 %v438
        %v509 = vpop.f32.mrb[0].mxu0
        %v510 = vadd.f32 %v427, %v509
        %v511 = vpop.f32.mrb[0].mxu0
        %v512 = vadd.f32 %v429, %v511
        %513 = vmatprep.mubr.f32.mxu0 0.0
        %514 = vmatmul.mubr.f32.gmra.mrb[0].mxu0 %v441
        %v515 = vpop.f32.mrb[0].mxu0
        %v516 = vadd.f32 %v433, %v515
        %v517 = vpop.f32.mrb[0].mxu0
        %v518 = vadd.f32 %v435, %v517
        %519 = vdwg.mxu0
        %v520 = vld [vmem:[%s4] sm:$0xff]
        %v521 = vld [vmem:[%s4 + $0x8] sm:$0xff]
        %523 = vset.pattern.permute.xlu0 0
        %524 = vperm.xlu0 %523, %v520
        %v525 = vpop.permute.xlu0 %524
        %528 = vset.pattern.permute.xlu0 0
        %529 = vperm.xlu0 %528, %v521
        %v530 = vpop.permute.xlu0 %529
        %v532 = vadd.f32 %v510, %v525
        %v533 = vadd.f32 %v512, %v525
        %v534 = vadd.f32 %v516, %v530
        %v535 = vadd.f32 %v518, %v530
        %v536 = vmax.f32 %v532, 0.0
        %v537 = vmax.f32 %v533, 0.0
        %v538 = vmax.f32 %v534, 0.0
        %v539 = vmax.f32 %v535, 0.0
        %v540 = vld [vmem:[%s5] sm:$0xff]
        %v541 = vld [vmem:[%s5 + $0x8] sm:$0xff]
        %543 = vset.pattern.permute.xlu0 0
        %544 = vperm.xlu0 %543, %v540
        %v545 = vpop.permute.xlu0 %544
        %548 = vset.pattern.permute.xlu0 0
        %549 = vperm.xlu0 %548, %v541
        %v550 = vpop.permute.xlu0 %549
        %v552 = vmul.f32 %v536, %v545
        %v553 = vmul.f32 %v537, %v545
        %v554 = vmul.f32 %v538, %v550
        %v555 = vmul.f32 %v539, %v550
        %v556 = vadd.f32 %v552, %v554
        %v557 = vrot.slane %v556, 4
        %v558 = vadd.f32 %v556, %v557
        %v559 = vrot.slane %v558, 2
        %v560 = vadd.f32 %v558, %v559
        %v561 = vrot.slane %v560, 1
        %v562 = vadd.f32 %v560, %v561
        %v563 = vadd.f32 %v553, %v555
        %v564 = vrot.slane %v563, 4
        %v565 = vadd.f32 %v563, %v564
        %v566 = vrot.slane %v565, 2
        %v567 = vadd.f32 %v565, %v566
        %v568 = vrot.slane %v567, 1
        %v569 = vadd.f32 %v567, %v568
        %s570 = sld [smem:[#allocation2]]
        %v571 = vstv %s570
        %v572 = vadd.f32 %v562, %v571
        %v573 = vadd.f32 %v569, %v571
        %v574 = vxor.u32 %v572, 2147483648
        %v575 = vxor.u32 %v573, 2147483648
        %v576 = vmul.f32 %v574, 1.442695
        %v577 = vpow.pop %v576
        %v578 = vmul.f32 %v575, 1.442695
        %v579 = vpow.pop %v578
        %v580 = vadd.f32 %v577, 1.0
        %v581 = vadd.f32 %v579, 1.0
        %v582 = vrcp.pop %v580
        %v583 = vmul.f32 1.0, %v582
        %v584 = vrcp.pop %v581
        %v585 = vmul.f32 1.0, %v584
        %v586 = vmul.f32 %v345, %v583
        %v587 = vmul.f32 %v346, %v585
        %588 = vst [vmem:[%s323] sm:$0xff] %v586
        %589 = vst [vmem:[%s323 + $0x8] sm:$0xff] %v587
        %s590 = sand.u32 %s205, 1
        %s591 = scalar_lea.sflag [#allocation4], %s590
        %s592 = sand.u32 %s205, 1
        %s593 = smul.addr %s592, 16
        %s594 = scalar_lea.vmem [#allocation3], %s593
        // Predicated region
        $region49: #{tpu_custom_call.1} parent=47 // pred_check
          %p595 = pneg %p215
        $region50: #{tpu_custom_call.1} parent=47 // pred_check_branch
          %597 = sbr.rel (%p595) target = $region52
        $region51: #{tpu_custom_call.1} parent=47 // pred_region
          %s598 = smul.u32 2, %s27
          %s600 = ssub.s32 256, 256
          %601 = vsyncadd %s591, %s600
          %s602 = smul.addr %s26, 2
          %s603 = sadd.s32 %s598, %s602
          %s604 = smul.addr %s603, 128
          %s605 = scalar_lea.hbm %s7, %s604
          %s607 = sshll.u32 %s594, 4
          %s608 = int_to_ptr.vmem [resolvable:$true] %s607
          %610 = dma.vmem_to_hbm [thread:$0]  %s608, 256, %s605, %s591
        $region52: #{tpu_custom_call.1} parent=47 // pred_fallthru
          _
      $region48: #{tpu_custom_call.1} parent=5 // pred_fallthru
        _
      %p611 = scmp.le.s32.totalorder 2, %s17
      // Predicated region
      $region53: #{tpu_custom_call.1} parent=5 // pred_check
        %p612 = pneg %p611
      $region54: #{tpu_custom_call.1} parent=5 // pred_check_branch
        %614 = sbr.rel (%p612) target = $region56
      $region55: #{tpu_custom_call.1} parent=5 // pred_region
        %s615 = ssub.s32 %s17, 2
        // Predicated region
        $region57: #{tpu_custom_call.1} parent=55 // pred_check
          %p616 = pneg %p221
        $region58: #{tpu_custom_call.1} parent=55 // pred_check_branch
          %618 = sbr.rel (%p616) target = $region60
        $region59: #{tpu_custom_call.1} parent=55 // pred_region
          %s619 = sand.u32 %s206, 1
          %s620 = scalar_lea.sflag [#allocation4], %s619
          %s621 = sand.u32 %s206, 1
          %s622 = smul.addr %s621, 16
          %s623 = scalar_lea.vmem [#allocation3], %s622
          %624 = dma.done %s620, 256
        $region60: #{tpu_custom_call.1} parent=55 // pred_fallthru
          _
      $region56: #{tpu_custom_call.1} parent=5 // pred_fallthru
        _
    $region6: #{tpu_custom_call.1} parent=1 // loop_footer
      %s21 = sadd.s32 1, %s17
    $region7: #{tpu_custom_call.1} parent=1 // loop_footer_branch
      %16 = sbr.rel target = $region3
    $region8: #{tpu_custom_call.1} parent=1 // loop_exit
      _
    %625 = vsyncpa [#allocation4], 1
    %s626 = scalar_lea.sflag [#allocation4], 1
    %627 = vsyncpa %s626, 1

</llo_original>
